<compile_context>
chip_gen: v6e
topology: v6e:2x2x1
jax: 0.10.0
libtpu: 0.0.40
codegen_flags: <defaults>
</compile_context>

<pallas_src>
import jax
import jax.numpy as jnp
from jax import lax
from jax.experimental import pallas as pl
from jax.experimental.pallas import tpu as pltpu


def _make_contrastive_kernel(temperature: float, penalty_weight: float, topk: int):
    inv_temp = float(1.0 / temperature)

    def kernel(img_ref, txt_ref, out_ref, logits_acc):
        k = pl.program_id(0)
        nk = pl.num_programs(0)

        @pl.when(k == 0)
        def _init():
            logits_acc[...] = jnp.zeros_like(logits_acc)

        # Partial logits: contract the last dims of both operands (A[B,tk] with
        # B[B,tk]^T). Mosaic lowers this "nt" form straight to the MXU without
        # an XLU transpose of the text tile. f32 accumulation.
        logits_acc[...] += lax.dot_general(
            img_ref[...], txt_ref[...],
            dimension_numbers=(((1,), (1,)), ((), ())),
            preferred_element_type=jnp.float32)

        @pl.when(k == nk - 1)
        def _epilogue():
            B = logits_acc.shape[0]
            inv_b = 1.0 / B

            # Temperature applied once here (scale-after-round); the rank and
            # argmax terms are invariant to a positive scale, the CE terms need
            # the scaled logits for the softmax.
            logits = logits_acc[...] * inv_temp                    # (B, B) f32

            row_ids = lax.broadcasted_iota(jnp.int32, (B, B), 0)
            col_ids = lax.broadcasted_iota(jnp.int32, (B, B), 1)
            diag_mask = row_ids == col_ids

            # Exact diagonal, extracted once and reused for BOTH directions so
            # self-comparisons (strict >) are exactly false everywhere.
            masked = jnp.where(diag_mask, logits, 0.0)
            diag_row = jnp.sum(masked, axis=0, keepdims=True)      # (1, B)
            diag_col = jnp.sum(masked, axis=1, keepdims=True)      # (B, 1)
            diag_sum = jnp.sum(diag_row)

            # ---- symmetric cross entropy ----
            m_row = jnp.max(logits, axis=1, keepdims=True)
            lse_row = m_row + jnp.log(
                jnp.sum(jnp.exp(logits - m_row), axis=1, keepdims=True))
            m_col = jnp.max(logits, axis=0, keepdims=True)
            lse_col = m_col + jnp.log(
                jnp.sum(jnp.exp(logits - m_col), axis=0, keepdims=True))
            loss_i2t = (jnp.sum(lse_row) - diag_sum) * inv_b
            loss_t2i = (jnp.sum(lse_col) - diag_sum) * inv_b
            total_loss = (loss_i2t + loss_t2i) * 0.5

            # ---- rank penalty (strict >, diagonal compares equal -> false) ----
            ranks_i2t = jnp.sum((logits > diag_col).astype(jnp.float32),
                                axis=1, keepdims=True)             # (B, 1)
            penalty_i2t = jnp.sum((ranks_i2t >= topk).astype(jnp.float32)) * inv_b
            ranks_t2i = jnp.sum((logits > diag_row).astype(jnp.float32),
                                axis=0, keepdims=True)             # (1, B)
            penalty_t2i = jnp.sum((ranks_t2i >= topk).astype(jnp.float32)) * inv_b
            total_loss = total_loss + 0.5 * (penalty_i2t + penalty_t2i) * penalty_weight

            # ---- acc_t2i: first-occurrence argmax over rows (axis=0) ----
            is_max = logits == m_col
            argmax_rows = jnp.min(jnp.where(is_max, row_ids, B),
                                  axis=0, keepdims=True)           # (1, B)
            correct = (argmax_rows ==
                       lax.broadcasted_iota(jnp.int32, (1, B), 1)).astype(jnp.float32)
            acc_t2i = jnp.sum(correct) * inv_b

            # packed scalar outputs: [loss, acc]
            out_ref[0, 0] = total_loss
            out_ref[0, 1] = acc_t2i

    return kernel


def _pick_tk(D: int, block_k: int) -> int:
    """Largest 128-multiple divisor of D that is <= min(block_k, 1024)."""
    if D % 128 != 0:
        return D  # full-array block is always legal
    cap = min(block_k, 1024)
    best = 0
    t = 128
    while t <= D:
        if D % t == 0 and t <= cap:
            best = t
        t += 128
    if best == 0:
        best = D if D <= cap else 128
    return best


def contrastive_loss_pallas(image_embedding, text_embedding, *, temperature=0.07,
                            penalty_weight=1.0, topk=5,
                            matmul_dtype=jnp.bfloat16, block_k=512):
    assert image_embedding.shape == text_embedding.shape
    B, D = image_embedding.shape

    # Cast MXU operands in the producer (halves DMA bytes for f32 inputs and
    # removes per-tile casts from the pipelined loop). matmul_dtype=None keeps
    # the input dtype as-is.
    if matmul_dtype is not None:
        image_embedding = image_embedding.astype(matmul_dtype)
        text_embedding = text_embedding.astype(matmul_dtype)

    tk = _pick_tk(D, block_k)
    nk = D // tk
    in_bytes = jnp.dtype(image_embedding.dtype).itemsize

    # accumulator + double-buffered inputs + epilogue-temp headroom
    needed = 4 * B * B + 2 * 2 * B * tk * in_bytes + 8 * 4 * B * B + (1 << 20)
    vmem_limit = int(min(max(needed, 32 << 20), 128 << 20))

    kernel = _make_contrastive_kernel(temperature, penalty_weight, topk)

    out = pl.pallas_call(
        kernel,
        out_shape=jax.ShapeDtypeStruct((1, 2), jnp.float32),
        grid_spec=pltpu.PrefetchScalarGridSpec(
            num_scalar_prefetch=0,
            grid=(nk,),
            in_specs=[
                pl.BlockSpec((B, tk), lambda k: (0, k)),
                pl.BlockSpec((B, tk), lambda k: (0, k)),
            ],
            out_specs=pl.BlockSpec(memory_space=pltpu.SMEM),
            scratch_shapes=[
                pltpu.VMEM((B, B), jnp.float32),   # resident logits accumulator
            ],
        ),
        compiler_params=pltpu.CompilerParams(
            dimension_semantics=("arbitrary",),
            vmem_limit_bytes=vmem_limit),
        cost_estimate=pl.CostEstimate(
            flops=2 * B * B * D,
            transcendentals=2 * B * B,
            bytes_accessed=2 * B * D * in_bytes + 8),
    )(image_embedding, text_embedding)
    return out[0, 0], out[0, 1]


def contrastive_loss_ref(image_embedding, text_embedding, *, temperature=0.07,
                         penalty_weight=1.0, topk=5, matmul_dtype=jnp.float32):
    """Pure-JAX reference mirroring the PyTorch module.

    `matmul_dtype` mirrors the kernel's MXU operand precision (operands rounded
    to bf16, f32 accumulation, temperature applied after the matmul) so the
    comparison is apples-to-apples.
    """
    B = image_embedding.shape[0]
    a = image_embedding.astype(matmul_dtype).astype(jnp.float32)
    b = text_embedding.astype(matmul_dtype).astype(jnp.float32)
    logits = (a @ b.T) * jnp.float32(1.0 / temperature)
    labels = jnp.arange(B)
    lse_row = jax.scipy.special.logsumexp(logits, axis=1)
    lse_col = jax.scipy.special.logsumexp(logits, axis=0)
    diag = jnp.diagonal(logits)
    loss_i2t = jnp.mean(lse_row - diag)
    loss_t2i = jnp.mean(lse_col - diag)
    total = (loss_i2t + loss_t2i) / 2
    ranks_i2t = jnp.sum(logits > diag[:, None], axis=1)
    penalty_i2t = jnp.mean((ranks_i2t >= topk).astype(jnp.float32))
    ranks_t2i = jnp.sum(logits.T > diag[:, None], axis=1)
    penalty_t2i = jnp.mean((ranks_t2i >= topk).astype(jnp.float32))
    total = total + penalty_weight * (penalty_i2t + penalty_t2i) / 2
    acc = jnp.mean((jnp.argmax(logits, axis=0) == labels).astype(jnp.float32))
    return total, acc


if __name__ == "__main__":
    B, D = 8, 32  # batch, embedding dim (toy shapes consistent with the module)
    key = jax.random.PRNGKey(0)
    k1, k2 = jax.random.split(key)
    img = jax.random.normal(k1, (B, D), dtype=jnp.float32)
    txt = jax.random.normal(k2, (B, D), dtype=jnp.float32)
    img = img / jnp.linalg.norm(img, axis=-1, keepdims=True)
    txt = txt / jnp.linalg.norm(txt, axis=-1, keepdims=True)

    # Default bf16-MXU path vs. precision-matched reference.
    loss, acc = contrastive_loss_pallas(img, txt)
    jax.block_until_ready((loss, acc))
    loss_r, acc_r = contrastive_loss_ref(img, txt, matmul_dtype=jnp.bfloat16)
    assert jnp.allclose(loss, loss_r, rtol=2e-3, atol=2e-3), (loss, loss_r)
    assert jnp.allclose(acc, acc_r, atol=1e-3), (acc, acc_r)

    # f32-MXU path vs. plain f32 reference (module semantics at full precision).
    loss32, acc32 = contrastive_loss_pallas(img, txt, matmul_dtype=jnp.float32)
    jax.block_until_ready((loss32, acc32))
    loss32_r, acc32_r = contrastive_loss_ref(img, txt)
    assert jnp.allclose(loss32, loss32_r, rtol=1e-3, atol=1e-3), (loss32, loss32_r)
    assert jnp.allclose(acc32, acc32_r, atol=1e-3), (acc32, acc32_r)

    print("KERNEL_OK")
</pallas_src>

<mosaic_0001>
module attributes {stable_mosaic.version = 11 : i64} {
  func.func @kernel(%arg0: i32, %arg1: memref<8x32xbf16, #tpu.memory_space<vmem>>, %arg2: memref<8x32xbf16, #tpu.memory_space<vmem>>, %arg3: memref<1x2xf32, #tpu.memory_space<smem>>, %arg4: memref<8x8xf32, #tpu.memory_space<vmem>>) attributes {dimension_semantics = [#tpu.dimension_semantics<arbitrary>], iteration_bounds = array<i64: 1>, scalar_prefetch = 0 : i64, scratch_operands = 1 : i64, tpu.core_type = #tpu.core_type<tc>, window_params = [{transform_indices = @transform_0, window_bounds = array<i64: 8, 32>}, {transform_indices = @transform_1, window_bounds = array<i64: 8, 32>}, {transform_indices = @transform_2, window_bounds = array<i64: 1, 2>}]} {
    %c0_i32 = arith.constant 0 : i32
    %0 = arith.cmpi eq, %arg0, %c0_i32 : i32
    %1 = arith.extui %0 : i1 to i32
    %c0_i32_0 = arith.constant 0 : i32
    %2 = arith.cmpi ne, %1, %c0_i32_0 : i32
    scf.if %2 {
      %cst_10 = arith.constant 0.000000e+00 : f32
      %12 = vector.broadcast %cst_10 : f32 to vector<8x8xf32>
      %c0_11 = arith.constant 0 : index
      %c0_12 = arith.constant 0 : index
      %13 = vector.load %arg4[%c0_11, %c0_12] : memref<8x8xf32, #tpu.memory_space<vmem>>, vector<8x8xf32>
      tpu.vector_store %arg4[%c0_11, %c0_12], %12 {strides = array<i32>} : memref<8x8xf32, #tpu.memory_space<vmem>>, vector<8x8xf32>,
    } else {
    }
    %c0 = arith.constant 0 : index
    %c0_1 = arith.constant 0 : index
    %3 = vector.load %arg4[%c0, %c0_1] : memref<8x8xf32, #tpu.memory_space<vmem>>, vector<8x8xf32>
    %c0_2 = arith.constant 0 : index
    %c0_3 = arith.constant 0 : index
    %4 = vector.load %arg1[%c0_2, %c0_3] : memref<8x32xbf16, #tpu.memory_space<vmem>>, vector<8x32xbf16>
    %c0_4 = arith.constant 0 : index
    %c0_5 = arith.constant 0 : index
    %5 = vector.load %arg2[%c0_4, %c0_5] : memref<8x32xbf16, #tpu.memory_space<vmem>>, vector<8x32xbf16>
    %cst = arith.constant dense<0.000000e+00> : vector<8x8xf32>
    %6 = tpu.matmul %4, %5, %cst {dimension_numbers = #tpu.dot_dimension_numbers<[1], [1], [0], [0], [0, 0, 1, 0], [], []>} : vector<8x32xbf16>, vector<8x32xbf16>, vector<8x8xf32> -> vector<8x8xf32>
    %7 = arith.addf %3, %6 : vector<8x8xf32>
    %c0_6 = arith.constant 0 : index
    %c0_7 = arith.constant 0 : index
    %8 = vector.load %arg4[%c0_6, %c0_7] : memref<8x8xf32, #tpu.memory_space<vmem>>, vector<8x8xf32>
    tpu.vector_store %arg4[%c0_6, %c0_7], %7 {strides = array<i32>} : memref<8x8xf32, #tpu.memory_space<vmem>>, vector<8x8xf32>,
    %c0_i32_8 = arith.constant 0 : i32
    %9 = arith.cmpi eq, %arg0, %c0_i32_8 : i32
    %10 = arith.extui %9 : i1 to i32
    %c0_i32_9 = arith.constant 0 : i32
    %11 = arith.cmpi ne, %10, %c0_i32_9 : i32
    scf.if %11 {
      %c0_10 = arith.constant 0 : index
      %c0_11 = arith.constant 0 : index
      %12 = vector.load %arg4[%c0_10, %c0_11] : memref<8x8xf32, #tpu.memory_space<vmem>>, vector<8x8xf32>
      %cst_12 = arith.constant 14.2857141 : f32
      %13 = vector.broadcast %cst_12 : f32 to vector<8x8xf32>
      %14 = arith.mulf %12, %13 : vector<8x8xf32>
      %15 = tpu.iota {dimensions = array<i32: 0>} : vector<8x8xi32>
      %16 = tpu.iota {dimensions = array<i32: 1>} : vector<8x8xi32>
      %17 = arith.cmpi eq, %15, %16 : vector<8x8xi32>
      %cst_13 = arith.constant 0.000000e+00 : f32
      %18 = vector.broadcast %cst_13 : f32 to vector<8x8xf32>
      %19 = arith.select %17, %14, %18 : vector<8x8xi1>, vector<8x8xf32>
      %cst_14 = arith.constant dense<0.000000e+00> : vector<8xf32>
      %20 = vector.multi_reduction <add>, %19, %cst_14 [0] : vector<8x8xf32> to vector<8xf32>
      %21 = vector.shape_cast %20 : vector<8xf32> to vector<1x8xf32>
      %cst_15 = arith.constant dense<0.000000e+00> : vector<8xf32>
      %22 = vector.multi_reduction <add>, %19, %cst_15 [1] : vector<8x8xf32> to vector<8xf32>
      %23 = vector.shape_cast %22 : vector<8xf32> to vector<8x1xf32>
      %24 = vector.shape_cast %21 : vector<1x8xf32> to vector<1x1x8xf32>
      %cst_16 = arith.constant dense<0.000000e+00> : vector<1xf32>
      %25 = vector.multi_reduction <add>, %24, %cst_16 [1, 2] : vector<1x1x8xf32> to vector<1xf32>
      %26 = vector.shape_cast %25 : vector<1xf32> to vector<1x1x1xf32>
      %27 = vector.extract %26[0, 0, 0] : f32 from vector<1x1x1xf32>
      %cst_17 = arith.constant dense<0xFF800000> : vector<8xf32>
      %28 = vector.multi_reduction <maximumf>, %14, %cst_17 [1] : vector<8x8xf32> to vector<8xf32>
      %29 = vector.shape_cast %28 : vector<8xf32> to vector<8x1xf32>
      %30 = vector.broadcast %29 : vector<8x1xf32> to vector<8x8xf32>
      %31 = arith.subf %14, %30 : vector<8x8xf32>
      %32 = math.exp %31 : vector<8x8xf32>
      %cst_18 = arith.constant dense<0.000000e+00> : vector<8xf32>
      %33 = vector.multi_reduction <add>, %32, %cst_18 [1] : vector<8x8xf32> to vector<8xf32>
      %34 = vector.shape_cast %33 : vector<8xf32> to vector<8x1xf32>
      %35 = math.log %34 : vector<8x1xf32>
      %36 = arith.addf %29, %35 : vector<8x1xf32>
      %cst_19 = arith.constant dense<0xFF800000> : vector<8xf32>
      %37 = vector.multi_reduction <maximumf>, %14, %cst_19 [0] : vector<8x8xf32> to vector<8xf32>
      %38 = vector.shape_cast %37 : vector<8xf32> to vector<1x8xf32>
      %39 = vector.broadcast %38 : vector<1x8xf32> to vector<8x8xf32>
      %40 = arith.subf %14, %39 : vector<8x8xf32>
      %41 = math.exp %40 : vector<8x8xf32>
      %cst_20 = arith.constant dense<0.000000e+00> : vector<8xf32>
      %42 = vector.multi_reduction <add>, %41, %cst_20 [0] : vector<8x8xf32> to vector<8xf32>
      %43 = vector.shape_cast %42 : vector<8xf32> to vector<1x8xf32>
      %44 = math.log %43 : vector<1x8xf32>
      %45 = arith.addf %38, %44 : vector<1x8xf32>
      %46 = vector.shape_cast %36 : vector<8x1xf32> to vector<1x8x1xf32>
      %cst_21 = arith.constant dense<0.000000e+00> : vector<1xf32>
      %47 = vector.multi_reduction <add>, %46, %cst_21 [1, 2] : vector<1x8x1xf32> to vector<1xf32>
      %48 = vector.shape_cast %47 : vector<1xf32> to vector<1x1x1xf32>
      %49 = vector.extract %48[0, 0, 0] : f32 from vector<1x1x1xf32>
      %50 = arith.subf %49, %27 : f32
      %cst_22 = arith.constant 1.250000e-01 : f32
      %51 = arith.mulf %50, %cst_22 : f32
      %52 = vector.shape_cast %45 : vector<1x8xf32> to vector<1x1x8xf32>
      %cst_23 = arith.constant dense<0.000000e+00> : vector<1xf32>
      %53 = vector.multi_reduction <add>, %52, %cst_23 [1, 2] : vector<1x1x8xf32> to vector<1xf32>
      %54 = vector.shape_cast %53 : vector<1xf32> to vector<1x1x1xf32>
      %55 = vector.extract %54[0, 0, 0] : f32 from vector<1x1x1xf32>
      %56 = arith.subf %55, %27 : f32
      %cst_24 = arith.constant 1.250000e-01 : f32
      %57 = arith.mulf %56, %cst_24 : f32
      %58 = arith.addf %51, %57 : f32
      %cst_25 = arith.constant 5.000000e-01 : f32
      %59 = arith.mulf %58, %cst_25 : f32
      %60 = vector.broadcast %23 : vector<8x1xf32> to vector<8x8xf32>
      %61 = arith.cmpf ogt, %14, %60 : vector<8x8xf32>
      %62 = arith.extui %61 : vector<8x8xi1> to vector<8x8xi32>
      %63 = arith.sitofp %62 : vector<8x8xi32> to vector<8x8xf32>
      %cst_26 = arith.constant dense<0.000000e+00> : vector<8xf32>
      %64 = vector.multi_reduction <add>, %63, %cst_26 [1] : vector<8x8xf32> to vector<8xf32>
      %65 = vector.shape_cast %64 : vector<8xf32> to vector<8x1xf32>
      %cst_27 = arith.constant 5.000000e+00 : f32
      %66 = vector.broadcast %cst_27 : f32 to vector<8x1xf32>
      %67 = arith.cmpf oge, %65, %66 : vector<8x1xf32>
      %68 = arith.extui %67 : vector<8x1xi1> to vector<8x1xi32>
      %69 = arith.sitofp %68 : vector<8x1xi32> to vector<8x1xf32>
      %70 = vector.shape_cast %69 : vector<8x1xf32> to vector<1x8x1xf32>
      %cst_28 = arith.constant dense<0.000000e+00> : vector<1xf32>
      %71 = vector.multi_reduction <add>, %70, %cst_28 [1, 2] : vector<1x8x1xf32> to vector<1xf32>
      %72 = vector.shape_cast %71 : vector<1xf32> to vector<1x1x1xf32>
      %73 = vector.extract %72[0, 0, 0] : f32 from vector<1x1x1xf32>
      %cst_29 = arith.constant 1.250000e-01 : f32
      %74 = arith.mulf %73, %cst_29 : f32
      %75 = vector.broadcast %21 : vector<1x8xf32> to vector<8x8xf32>
      %76 = arith.cmpf ogt, %14, %75 : vector<8x8xf32>
      %77 = arith.extui %76 : vector<8x8xi1> to vector<8x8xi32>
      %78 = arith.sitofp %77 : vector<8x8xi32> to vector<8x8xf32>
      %cst_30 = arith.constant dense<0.000000e+00> : vector<8xf32>
      %79 = vector.multi_reduction <add>, %78, %cst_30 [0] : vector<8x8xf32> to vector<8xf32>
      %80 = vector.shape_cast %79 : vector<8xf32> to vector<1x8xf32>
      %cst_31 = arith.constant 5.000000e+00 : f32
      %81 = vector.broadcast %cst_31 : f32 to vector<1x8xf32>
      %82 = arith.cmpf oge, %80, %81 : vector<1x8xf32>
      %83 = arith.extui %82 : vector<1x8xi1> to vector<1x8xi32>
      %84 = arith.sitofp %83 : vector<1x8xi32> to vector<1x8xf32>
      %85 = vector.shape_cast %84 : vector<1x8xf32> to vector<1x1x8xf32>
      %cst_32 = arith.constant dense<0.000000e+00> : vector<1xf32>
      %86 = vector.multi_reduction <add>, %85, %cst_32 [1, 2] : vector<1x1x8xf32> to vector<1xf32>
      %87 = vector.shape_cast %86 : vector<1xf32> to vector<1x1x1xf32>
      %88 = vector.extract %87[0, 0, 0] : f32 from vector<1x1x1xf32>
      %cst_33 = arith.constant 1.250000e-01 : f32
      %89 = arith.mulf %88, %cst_33 : f32
      %90 = arith.addf %74, %89 : f32
      %cst_34 = arith.constant 5.000000e-01 : f32
      %91 = arith.mulf %cst_34, %90 : f32
      %cst_35 = arith.constant 1.000000e+00 : f32
      %92 = arith.mulf %91, %cst_35 : f32
      %93 = arith.addf %59, %92 : f32
      %94 = vector.broadcast %38 : vector<1x8xf32> to vector<8x8xf32>
      %95 = arith.cmpf oeq, %14, %94 : vector<8x8xf32>
      %c8_i32 = arith.constant 8 : i32
      %96 = vector.broadcast %c8_i32 : i32 to vector<8x8xi32>
      %97 = arith.select %95, %15, %96 : vector<8x8xi1>, vector<8x8xi32>
      %cst_36 = arith.constant dense<2147483647> : vector<8xi32>
      %98 = vector.multi_reduction <minsi>, %97, %cst_36 [0] : vector<8x8xi32> to vector<8xi32>
      %99 = vector.shape_cast %98 : vector<8xi32> to vector<1x8xi32>
      %100 = tpu.iota {dimensions = array<i32: 1>} : vector<1x8xi32>
      %101 = arith.cmpi eq, %99, %100 : vector<1x8xi32>
      %102 = arith.extui %101 : vector<1x8xi1> to vector<1x8xi32>
      %103 = arith.sitofp %102 : vector<1x8xi32> to vector<1x8xf32>
      %104 = vector.shape_cast %103 : vector<1x8xf32> to vector<1x1x8xf32>
      %cst_37 = arith.constant dense<0.000000e+00> : vector<1xf32>
      %105 = vector.multi_reduction <add>, %104, %cst_37 [1, 2] : vector<1x1x8xf32> to vector<1xf32>
      %106 = vector.shape_cast %105 : vector<1xf32> to vector<1x1x1xf32>
      %107 = vector.extract %106[0, 0, 0] : f32 from vector<1x1x1xf32>
      %cst_38 = arith.constant 1.250000e-01 : f32
      %108 = arith.mulf %107, %cst_38 : f32
      %c0_39 = arith.constant 0 : index
      %c0_40 = arith.constant 0 : index
      %109 = memref.load %arg3[%c0_39, %c0_40] : memref<1x2xf32, #tpu.memory_space<smem>>
      memref.store %93, %arg3[%c0_39, %c0_40] : memref<1x2xf32, #tpu.memory_space<smem>>
      %c0_41 = arith.constant 0 : index
      %c1 = arith.constant 1 : index
      %110 = memref.load %arg3[%c0_41, %c1] : memref<1x2xf32, #tpu.memory_space<smem>>
      memref.store %108, %arg3[%c0_41, %c1] : memref<1x2xf32, #tpu.memory_space<smem>>
    } else {
    }
    return
  }
  func.func @transform_0(%arg0: i32) -> (i32, i32) {
    %c0_i32 = arith.constant 0 : i32
    %c0_i32_0 = arith.constant 0 : i32
    return %c0_i32, %arg0 : i32, i32
  }
  func.func @transform_1(%arg0: i32) -> (i32, i32) {
    %c0_i32 = arith.constant 0 : i32
    %c0_i32_0 = arith.constant 0 : i32
    return %c0_i32, %arg0 : i32, i32
  }
  func.func @transform_2(%arg0: i32) -> (i32, i32) {
    %c0_i32 = arith.constant 0 : i32
    %c0_i32_0 = arith.constant 0 : i32
    %c0_i32_1 = arith.constant 0 : i32
    return %c0_i32, %c0_i32_0 : i32, i32
  }
}

</mosaic_0001>

<llo_original>
// kernel: tpu_custom_call.1
$region0: #{tpu_custom_call.1}
  #allocation0 [shape = 'u32[]', space=smem, size = 0x4, offset = 0x4, fixed_abs, tag = 'smem constant byte address 0x4 - core index']
  #allocation1 [shape = 'u32[144,128]{1,0:T(1,128)}', space=vmem, size = 0x12000, scoped, tag = 'internal scratch']
  #allocation2 [shape = 'f32[8,8]{1,0:T(8,128)}', space=vmem, size = 0x1000, scoped, tag = 'scratch operand']
  %s0 = inlined_call_operand.hbm [shape: bf16[8,32], index: 0, kind: input, shape index: {}]
  %s1 = inlined_call_operand.hbm [shape: bf16[8,32], index: 1, kind: input, shape index: {}]
  %s2 = inlined_call_operand.hbm [shape: f32[1,2], index: 2, kind: output, shape index: {}]
  %s3 = sld [smem:[#allocation0]]
  $region34: #{tpu_custom_call.1} parent=0
    _
  %s5 = ssub.s32 1, %s3
  %s6 = scalar_select 0, %s5, %s3
  $region1: #{tpu_custom_call.1} parent=0
    #allocation3 [shape = 'u8[2048]{0}', space=vmem, size = 0x800, scoped, tag = 'input window, operand 0, single buffered']
    #allocation4 [shape = 's32[1]{0}', space=sflag, size = 0x4, scoped, tag = 'scoped memory for tpu_custom_call.1']
    #allocation5 [shape = 's32[1]{0}', space=sflag, size = 0x4, scoped, tag = 'scoped memory for tpu_custom_call.1']
    #allocation6 [shape = 'u8[2048]{0}', space=vmem, size = 0x800, scoped, tag = 'input window, operand 1, single buffered']
    #allocation7 [shape = 's32[1]{0}', space=sflag, size = 0x4, scoped, tag = 'scoped memory for tpu_custom_call.1']
    #allocation8 [shape = 'u8[512]{0}', space=smem, size = 0x200, scoped, tag = 'output window, operand 0, single buffered']
    %7 = vsyncpa [#allocation4], 0
    %8 = vsyncpa [#allocation7], 0
    %9 = vsyncpa [#allocation5], 0
    // Predicated region
    $region2: #{tpu_custom_call.1} parent=1 // pred_check
      _
    $region3: #{tpu_custom_call.1} parent=1 // pred_check_branch
      %11 = sbr.rel (0) target = $region5
    $region4: #{tpu_custom_call.1} parent=1 // pred_region
      %s13 = ssub.s32 64, 64
      %14 = vsyncadd [#allocation4], %s13
      %s16 = sshll.u32 [#allocation3], 4
      %s17 = int_to_ptr.vmem [resolvable:$true] %s16
      %19 = dma.hbm_to_vmem [thread:$0]  %s0, 64, %s17, [#allocation4]
    $region5: #{tpu_custom_call.1} parent=1 // pred_fallthru
      _
    // Predicated region
    $region6: #{tpu_custom_call.1} parent=1 // pred_check
      _
    $region7: #{tpu_custom_call.1} parent=1 // pred_check_branch
      %21 = sbr.rel (0) target = $region9
    $region8: #{tpu_custom_call.1} parent=1 // pred_region
      %s23 = ssub.s32 64, 64
      %24 = vsyncadd [#allocation7], %s23
      %s26 = sshll.u32 [#allocation6], 4
      %s27 = int_to_ptr.vmem [resolvable:$true] %s26
      %29 = dma.hbm_to_vmem [thread:$0]  %s1, 64, %s27, [#allocation7]
    $region9: #{tpu_custom_call.1} parent=1 // pred_fallthru
      _
    // Predicated region
    $region10: #{tpu_custom_call.1} parent=1 // pred_check
      _
    $region11: #{tpu_custom_call.1} parent=1 // pred_check_branch
      %31 = sbr.rel (0) target = $region13
    $region12: #{tpu_custom_call.1} parent=1 // pred_region
      %32 = dma.done [#allocation4], 64
    $region13: #{tpu_custom_call.1} parent=1 // pred_fallthru
      _
    // Predicated region
    $region14: #{tpu_custom_call.1} parent=1 // pred_check
      _
    $region15: #{tpu_custom_call.1} parent=1 // pred_check_branch
      %34 = sbr.rel (0) target = $region17
    $region16: #{tpu_custom_call.1} parent=1 // pred_region
      %35 = dma.done [#allocation7], 64
    $region17: #{tpu_custom_call.1} parent=1 // pred_fallthru
      _
    %p37 = scmp.eq.s32.totalorder 0, 0
    // Predicated region
    $region18: #{tpu_custom_call.1} parent=1 // pred_check
      %p38 = pneg %p37
    $region19: #{tpu_custom_call.1} parent=1 // pred_check_branch
      %40 = sbr.rel (%p38) target = $region21
    $region20: #{tpu_custom_call.1} parent=1 // pred_region
      %vm41 = vcmask 64512
      %42 = vst.msk [vmem:[#allocation2] sm:$0xff] %vm41, 0.0
    $region21: #{tpu_custom_call.1} parent=1 // pred_fallthru
      _
    %v43 = vld [vmem:[#allocation2] sm:$0xff]
    %v44 = vld [vmem:[#allocation3] sm:$0xf]
    %v45 = vld [vmem:[#allocation6] sm:$0xf]
    %vm46 = vcmask 261120
    %v48 = vsel %vm46, %v44, 0
    %v51 = vsel %vm46, %v45, 0
    %53 = vmatprep.subr.bf16.mxu0 0
    %54 = vmatpush1.bf16.xpose.msra.mxu0 0
    %55 = vmatprep.subr.bf16.mxu0 0
    %56 = vmatpush1.bf16.xpose.msra.mxu0 0
    %57 = vmatprep.subr.bf16.mxu0 0
    %58 = vmatpush1.bf16.xpose.msra.mxu0 0
    %59 = vmatprep.subr.bf16.mxu0 0
    %60 = vmatpush1.bf16.xpose.msra.mxu0 0
    %61 = vmatprep.subr.bf16.mxu0 0
    %62 = vmatpush1.bf16.xpose.msra.mxu0 0
    %63 = vmatprep.subr.bf16.mxu0 0
    %64 = vmatpush1.bf16.xpose.msra.mxu0 0
    %65 = vmatprep.subr.bf16.mxu0 0
    %66 = vmatpush1.bf16.xpose.msra.mxu0 0
    %67 = vmatprep.subr.bf16.mxu0 0
    %68 = vmatpush1.bf16.xpose.msra.mxu0 %v51
    %69 = vmatprep.subr.bf16.mxu0 0
    %70 = vmatpush2.bf16.xpose.msra.mxu0 0
    %71 = vmatprep.subr.bf16.mxu0 0
    %72 = vmatpush2.bf16.xpose.msra.mxu0 0
    %73 = vmatprep.subr.bf16.mxu0 0
    %74 = vmatpush2.bf16.xpose.msra.mxu0 0
    %75 = vmatprep.subr.bf16.mxu0 0
    %76 = vmatpush2.bf16.xpose.msra.mxu0 0
    %77 = vmatprep.subr.bf16.mxu0 0
    %78 = vmatpush2.bf16.xpose.msra.mxu0 0
    %79 = vmatprep.subr.bf16.mxu0 0
    %80 = vmatpush2.bf16.xpose.msra.mxu0 0
    %81 = vmatprep.subr.bf16.mxu0 0
    %82 = vmatpush2.bf16.xpose.msra.mxu0 0
    %83 = vmatprep.subr.bf16.mxu0 0
    %84 = vmatpush2.bf16.xpose.msra.mxu0 0
    %85 = vmatprep.mubr.bf16.mxu0 0
    %86 = vmatmul.mubr.bf16.gmra.mxu0 %v48
    %v87 = vpop.f32.mrf.mxu0
    %v88 = vadd.f32 0.0, %v87
    %v89 = vpop.f32.mrf.mxu0
    %v90 = vpop.f32.mrf.mxu0
    %v91 = vpop.f32.mrf.mxu0
    %92 = vdwg.mxu0
    %v93 = vadd.f32 %v43, %v88
    %vm94 = vcmask 64512
    %95 = vst.msk [vmem:[#allocation2] sm:$0xff] %vm94, %v93
    // Predicated region
    $region22: #{tpu_custom_call.1} parent=1 // pred_check
      %p96 = pneg %p37
    $region23: #{tpu_custom_call.1} parent=1 // pred_check_branch
      %98 = sbr.rel (%p96) target = $region25
    $region24: #{tpu_custom_call.1} parent=1 // pred_region
      %v99 = vld [vmem:[#allocation2] sm:$0xff]
      %v100 = vmul.f32 %v99, 14.285714
      %v101 = vlaneseq
      %v102 = vshrl.u32 %v101, 7
      %v103 = vlaneseq
      %v104 = vand.u32 %v103, 127
      %vm105 = vcmp.eq.s32.totalorder %v102, %v104
      %v106 = vsel %vm105, %v100, 0.0
      %v107 = vsel %vm94, %v106, 0.0
      %v108 = vrot.slane %v107, 4
      %v109 = vadd.f32 %v107, %v108
      %v110 = vrot.slane %v109, 2
      %v111 = vadd.f32 %v109, %v110
      %v112 = vrot.slane %v111, 1
      %v113 = vadd.f32 %v111, %v112
      %114 = vadd.xlane.f32.xlu0 %v107
      %v115 = vpop.xlane.xlu0 %114
      %vm116 = vcmask 57344
      %v117 = vsel %vm116, %v113, 0.0
      %118 = vadd.xlane.f32.xlu0 %v117
      %v119 = vpop.xlane.xlu0 %118
      %v120 = vrot.slane %v119, 4
      %v121 = vadd.f32 %v119, %v120
      %v122 = vrot.slane %v121, 2
      %v123 = vadd.f32 %v121, %v122
      %v124 = vrot.slane %v123, 1
      %v125 = vadd.f32 %v123, %v124
      %s126 = vtos %v125
      %v127 = vsel %vm94, %v100, -inf
      %128 = vmax.xlane.f32.xlu0 %v127
      %v129 = vpop.xlane.xlu0 %128
      %v130 = vsub.f32 %v100, %v129
      %v131 = vmul.f32 %v130, 1.442695
      %v132 = vpow.pop %v131
      %v133 = vsel %vm94, %v132, 0.0
      %134 = vadd.xlane.f32.xlu0 %v133
      %v135 = vpop.xlane.xlu0 %134
      %v136 = vlog2.pop %v135
      %v137 = vmul.f32 %v136, 0.6931472
      %v138 = vadd.f32 %v129, %v137
      %v139 = vrot.slane %v127, 4
      %v140 = vmax.f32 %v127, %v139
      %v141 = vrot.slane %v140, 2
      %v142 = vmax.f32 %v140, %v141
      %v143 = vrot.slane %v142, 1
      %v144 = vmax.f32 %v142, %v143
      %v145 = vsub.f32 %v100, %v144
      %v146 = vmul.f32 %v145, 1.442695
      %v147 = vpow.pop %v146
      %v148 = vsel %vm94, %v147, 0.0
      %v149 = vrot.slane %v148, 4
      %v150 = vadd.f32 %v148, %v149
      %v151 = vrot.slane %v150, 2
      %v152 = vadd.f32 %v150, %v151
      %v153 = vrot.slane %v152, 1
      %v154 = vadd.f32 %v152, %v153
      %v155 = vlog2.pop %v154
      %v156 = vmul.f32 %v155, 0.6931472
      %v157 = vadd.f32 %v144, %v156
      %vm158 = vcmask 7168
      %v159 = vsel %vm158, %v138, 0.0
      %160 = vadd.xlane.f32.xlu0 %v159
      %v161 = vpop.xlane.xlu0 %160
      %v162 = vrot.slane %v161, 4
      %v163 = vadd.f32 %v161, %v162
      %v164 = vrot.slane %v163, 2
      %v165 = vadd.f32 %v163, %v164
      %v166 = vrot.slane %v165, 1
      %v167 = vadd.f32 %v165, %v166
      %s168 = vtos %v167
      %s169 = ssub.f32 %s168, %s126
      %s170 = smul.f32 %s169, 0.125
      %v171 = vsel %vm116, %v157, 0.0
      %172 = vadd.xlane.f32.xlu0 %v171
      %v173 = vpop.xlane.xlu0 %172
      %v174 = vrot.slane %v173, 4
      %v175 = vadd.f32 %v173, %v174
      %v176 = vrot.slane %v175, 2
      %v177 = vadd.f32 %v175, %v176
      %v178 = vrot.slane %v177, 1
      %v179 = vadd.f32 %v177, %v178
      %s180 = vtos %v179
      %s181 = ssub.f32 %s180, %s126
      %s182 = smul.f32 %s181, 0.125
      %s183 = sadd.f32 %s170, %s182
      %s184 = smul.f32 %s183, 0.5
      %vm185 = vcmp.gt.f32.partialorder %v100, %v115
      %v186 = vsel %vm185, 1, 0
      %v187 = vcvt.s32.f32 %v186
      %v188 = vsel %vm94, %v187, 0.0
      %189 = vadd.xlane.f32.xlu0 %v188
      %v190 = vpop.xlane.xlu0 %189
      %vm191 = vcmp.ge.f32.partialorder %v190, 5.0
      %v192 = vsel %vm191, 1, 0
      %v193 = vcvt.s32.f32 %v192
      %v194 = vsel %vm158, %v193, 0.0
      %195 = vadd.xlane.f32.xlu0 %v194
      %v196 = vpop.xlane.xlu0 %195
      %v197 = vrot.slane %v196, 4
      %v198 = vadd.f32 %v196, %v197
      %v199 = vrot.slane %v198, 2
      %v200 = vadd.f32 %v198, %v199
      %v201 = vrot.slane %v200, 1
      %v202 = vadd.f32 %v200, %v201
      %s203 = vtos %v202
      %s204 = smul.f32 %s203, 0.125
      %vm205 = vcmp.gt.f32.partialorder %v100, %v113
      %v206 = vsel %vm205, 1, 0
      %v207 = vcvt.s32.f32 %v206
      %v208 = vsel %vm94, %v207, 0.0
      %v209 = vrot.slane %v208, 4
      %v210 = vadd.f32 %v208, %v209
      %v211 = vrot.slane %v210, 2
      %v212 = vadd.f32 %v210, %v211
      %v213 = vrot.slane %v212, 1
      %v214 = vadd.f32 %v212, %v213
      %vm215 = vcmp.ge.f32.partialorder %v214, 5.0
      %v216 = vsel %vm215, 1, 0
      %v217 = vcvt.s32.f32 %v216
      %v218 = vsel %vm116, %v217, 0.0
      %219 = vadd.xlane.f32.xlu0 %v218
      %v220 = vpop.xlane.xlu0 %219
      %v221 = vrot.slane %v220, 4
      %v222 = vadd.f32 %v220, %v221
      %v223 = vrot.slane %v222, 2
      %v224 = vadd.f32 %v222, %v223
      %v225 = vrot.slane %v224, 1
      %v226 = vadd.f32 %v224, %v225
      %s227 = vtos %v226
      %s228 = smul.f32 %s227, 0.125
      %s229 = sadd.f32 %s204, %s228
      %s230 = smul.f32 %s229, 0.5
      %s231 = sadd.f32 %s184, %s230
      %vm232 = vcmp.eq.f32.partialorder %v100, %v144
      %v233 = vsel %vm232, %v102, 8
      %v234 = vsel %vm94, %v233, 2147483647
      %v235 = vrot.slane %v234, 4
      %vm236 = vcmp.lt.s32.totalorder %v234, %v235
      %v237 = vsel %vm236, %v234, %v235
      %v238 = vrot.slane %v237, 2
      %vm239 = vcmp.lt.s32.totalorder %v237, %v238
      %v240 = vsel %vm239, %v237, %v238
      %v241 = vrot.slane %v240, 1
      %vm242 = vcmp.lt.s32.totalorder %v240, %v241
      %v243 = vsel %vm242, %v240, %v241
      %vm244 = vcmp.eq.s32.totalorder %v243, %v104
      %v245 = vsel %vm244, 1, 0
      %v246 = vcvt.s32.f32 %v245
      %v247 = vsel %vm116, %v246, 0.0
      %248 = vadd.xlane.f32.xlu0 %v247
      %v249 = vpop.xlane.xlu0 %248
      %v250 = vrot.slane %v249, 4
      %v251 = vadd.f32 %v249, %v250
      %v252 = vrot.slane %v251, 2
      %v253 = vadd.f32 %v251, %v252
      %v254 = vrot.slane %v253, 1
      %v255 = vadd.f32 %v253, %v254
      %s256 = vtos %v255
      %s257 = smul.f32 %s256, 0.125
      %s258 = scalar_lea.smem [#allocation8], 0
      %259 = sst [smem:[%s258]] %s231
      %s260 = scalar_lea.smem [#allocation8], 1
      %261 = sst [smem:[%s260]] %s257
    $region25: #{tpu_custom_call.1} parent=1 // pred_fallthru
      _
    // Predicated region
    $region26: #{tpu_custom_call.1} parent=1 // pred_check
      _
    $region27: #{tpu_custom_call.1} parent=1 // pred_check_branch
      %263 = sbr.rel (0) target = $region29
    $region28: #{tpu_custom_call.1} parent=1 // pred_region
      %s265 = ssub.s32 16, 16
      %266 = vsyncadd [#allocation5], %s265
      %269 = dma.smem_to_hbm [#allocation8], 16, %s2, [#allocation5]
    $region29: #{tpu_custom_call.1} parent=1 // pred_fallthru
      _
    // Predicated region
    $region30: #{tpu_custom_call.1} parent=1 // pred_check
      _
    $region31: #{tpu_custom_call.1} parent=1 // pred_check_branch
      %271 = sbr.rel (0) target = $region33
    $region32: #{tpu_custom_call.1} parent=1 // pred_region
      %272 = dma.done [#allocation5], 16
    $region33: #{tpu_custom_call.1} parent=1 // pred_fallthru
      _
    %273 = sfence
    %274 = vsyncpa [#allocation4], 1
    %275 = vsyncpa [#allocation7], 1
    %276 = vsyncpa [#allocation5], 1

</llo_original>
